<compile_context>
chip_gen: v5e
topology: v5e:2x2
jax: 0.10.0
libtpu: 0.0.40
codegen_flags: <defaults>
</compile_context>

<pallas_src>
import functools

import jax
import jax.numpy as jnp
from jax.experimental import pallas as pl
from jax.experimental.pallas import tpu as pltpu

ALPHA = 1.0
GAMMA = 2
IGNORE_INDEX = -1


def _round_up(x, m):
    return ((x + m - 1) // m) * m


def _round_down(x, m):
    return (x // m) * m


def _focal_loss_kernel(x_ref, t_ref, out_ref, *, gamma, ignore_index,
                       n_pack, tile_rows, n_cls, k):
    """One grid step: `tile_rows` packed rows, each holding k original rows of n_cls logits."""
    i = pl.program_id(0)

    x = x_ref[...].astype(jnp.float32)                        # (TM, L) packed logits, L = k*C
    t = t_ref[...]                                            # (TM, k) int32 targets

    # Validity: packed rows past the end of the array (partial last tile) and
    # ignore_index entries.  Everything is masked BEFORE any reduction.
    prow = i * tile_rows + jax.lax.broadcasted_iota(jnp.int32, t.shape, 0)
    valid = (prow < n_pack) & (t != ignore_index)             # (TM, k)
    safe_t = jnp.where(valid, t, 0)                           # (TM, k), in [0, C)

    lane = jax.lax.broadcasted_iota(jnp.int32, x.shape, 1)    # (TM, L)

    if k == 1:
        # Unpacked path (C > 64): one row per packed row.
        m = jnp.max(x, axis=-1, keepdims=True)                # (TM, 1)
        z = x - m
        e = jnp.exp(z)
        sum_e = jnp.sum(e, axis=-1, keepdims=True)            # (TM, 1)
        tz = jnp.sum(jnp.where(lane == safe_t, z, 0.0), axis=-1, keepdims=True)
    else:
        # --- per-segment (per original row) max, broadcast back over its C lanes ---
        m_bc = jnp.zeros_like(x)
        for j in range(k):
            seg_mask = (lane >= j * n_cls) & (lane < (j + 1) * n_cls)
            m_j = jnp.max(jnp.where(seg_mask, x, -jnp.inf), axis=-1, keepdims=True)
            m_bc = jnp.where(seg_mask, m_j, m_bc)
        z = x - m_bc                                          # (TM, L)
        e = jnp.exp(z)                                        # single EUP pass covers k rows

        # --- per-segment sum(exp) and target logit, compacted into (TM, k) ---
        out_col = jax.lax.broadcasted_iota(jnp.int32, t.shape, 1)    # (TM, k)
        g = safe_t + out_col * n_cls                          # global target lane per segment
        sum_e = jnp.zeros(t.shape, jnp.float32)
        tz = jnp.zeros(t.shape, jnp.float32)
        for j in range(k):
            seg_mask = (lane >= j * n_cls) & (lane < (j + 1) * n_cls)
            se_j = jnp.sum(jnp.where(seg_mask, e, 0.0), axis=-1, keepdims=True)
            hit_j = lane == g[:, j:j + 1]                     # only fires inside segment j
            tz_j = jnp.sum(jnp.where(hit_j, z, 0.0), axis=-1, keepdims=True)
            sum_e = jnp.where(out_col == j, se_j, sum_e)
            tz = jnp.where(out_col == j, tz_j, tz)

    # Per original row: ce = -log softmax[target]; pt = exp(-ce) (EUP, no extra reduce).
    ce = jnp.log(sum_e) - tz                                  # (TM, k)
    pt = jnp.exp(-ce)
    one_minus_pt = 1.0 - pt
    if gamma == 2:                                            # static specialization: VALU square
        mod = one_minus_pt * one_minus_pt
    elif gamma == 1:
        mod = one_minus_pt
    elif gamma == 0:
        mod = jnp.ones_like(one_minus_pt)
    else:
        mod = jnp.maximum(one_minus_pt, 0.0) ** gamma         # clamp: pt can round past 1
    fl = jnp.where(valid, mod * ce, 0.0)                      # single masking select; alpha on host

    # Per-tile partials (no cross-iteration state): lane 0 = sum, lane 1 = count.
    s = jnp.sum(fl)
    c = jnp.sum(valid.astype(jnp.float32))
    out_lane = jax.lax.broadcasted_iota(jnp.int32, out_ref.shape, 2)  # (1, 8, 128)
    out_ref[...] = jnp.where(out_lane == 0, s, jnp.where(out_lane == 1, c, 0.0))


def focal_loss(inputs, targets, *, alpha=ALPHA, gamma=GAMMA,
               ignore_index=IGNORE_INDEX, tile_rows=None,
               vmem_budget_bytes=12 * 1024 * 1024):
    """Masked-mean focal loss. inputs: (..., C) float, targets: (...) int."""
    C = inputs.shape[-1]
    x = inputs.reshape(-1, C)                     # native dtype, no extra HBM copy
    t = targets.reshape(-1).astype(jnp.int32)
    N = x.shape[0]

    # Lane-packing factor: pack k rows of C classes into one (<=128-lane) packed row.
    k = max(1, min(32, 128 // C)) if C <= 64 else 1
    n_main = (N // k) * k
    n_pack = n_main // k
    L = k * C

    in_bytes = jnp.dtype(x.dtype).itemsize
    sub = {1: 32, 2: 16, 4: 8}.get(in_bytes, 8)   # sublane multiple for the input dtype

    total = jnp.float32(0.0)
    count = jnp.float32(0.0)

    if n_pack > 0:
        x_main = x[:n_main].reshape(n_pack, L)    # free, row-major preserving reshape
        t_main = t[:n_main].reshape(n_pack, k)

        # --- honest (lane-padded) VMEM accounting for the auto row tile ---
        L_pad = _round_up(L, 128)
        row_bytes = (2 * L_pad * in_bytes         # double-buffered logits block
                     + 2 * 128 * 4                # double-buffered int32 targets block
                     + 4 * L_pad * 4              # f32 working slabs (x_f32/z/e/m_bc/selects)
                     + 10 * 128 * 4)              # lane-padded per-row / segment temporaries
        vmem_limit = None
        if tile_rows is None:
            tr = max(sub, min(2048, _round_down(vmem_budget_bytes // row_bytes, sub)))
            if tr < 8 * sub:
                # Very large C: raise the scoped-VMEM budget so the row tile does not
                # collapse to the sublane minimum (per-grid-step overhead dominates).
                # TODO(synk): for vocab-scale C, add an inner C-tile grid axis with an online log-sum-exp instead of a bigger block.
                big_budget = 24 * 1024 * 1024
                tr = max(sub, min(2048, _round_down(big_budget // row_bytes, sub)))
                vmem_limit = 26 * 1024 * 1024
            tile_rows = tr
        tile_rows = max(sub, _round_down(int(tile_rows), sub))
        # Keep >= 2 grid steps whenever possible so v7x's second TensorCore has work.
        two_way = _round_up(-(-n_pack // 2), sub)
        tile_rows = max(sub, min(tile_rows, two_way))

        n_tiles = pl.cdiv(n_pack, tile_rows)

        kernel = functools.partial(
            _focal_loss_kernel, gamma=gamma, ignore_index=int(ignore_index),
            n_pack=n_pack, tile_rows=tile_rows, n_cls=C, k=k)

        cparams = dict(dimension_semantics=("parallel",))
        if vmem_limit is not None:
            cparams["vmem_limit_bytes"] = vmem_limit

        partials = pl.pallas_call(
            kernel,
            out_shape=jax.ShapeDtypeStruct((n_tiles, 8, 128), jnp.float32),
            grid_spec=pltpu.PrefetchScalarGridSpec(
                num_scalar_prefetch=0,
                grid=(n_tiles,),
                in_specs=[
                    pl.BlockSpec((tile_rows, L), lambda i: (i, 0)),
                    pl.BlockSpec((tile_rows, k), lambda i: (i, 0)),
                ],
                out_specs=pl.BlockSpec((1, 8, 128), lambda i: (i, 0, 0)),
            ),
            compiler_params=pltpu.CompilerParams(**cparams),
        )(x_main, t_main)

        total = jnp.sum(partials[:, 0, 0])
        count = jnp.sum(partials[:, 0, 1])

    if n_main < N:
        # < k leftover rows (at most 127): fold them in with plain JAX so the packed
        # main path never needs a padding copy of the logits.
        xt = x[n_main:].astype(jnp.float32)
        tt = t[n_main:]
        vmask = tt != ignore_index
        st = jnp.where(vmask, tt, 0)
        m = jnp.max(xt, axis=-1, keepdims=True)
        z = xt - m
        lse = jnp.log(jnp.sum(jnp.exp(z), axis=-1))
        tz = jnp.take_along_axis(z, st[:, None], axis=-1)[:, 0]
        ce = lse - tz
        pt = jnp.exp(-ce)
        if gamma == 2:
            mod = (1.0 - pt) * (1.0 - pt)
        elif gamma == 1:
            mod = 1.0 - pt
        elif gamma == 0:
            mod = jnp.ones_like(pt)
        else:
            mod = jnp.maximum(1.0 - pt, 0.0) ** gamma
        total = total + jnp.sum(jnp.where(vmask, mod * ce, 0.0))
        count = count + jnp.sum(vmask.astype(jnp.float32))

    # reduction='mean' over the non-ignored rows; alpha folded into the final scale.
    # PyTorch's .mean() over an empty selection is NaN; we return 0 instead.
    return (alpha * total) / jnp.maximum(count, 1.0)


def _focal_loss_ref(inputs, targets, alpha=ALPHA, gamma=GAMMA,
                    ignore_index=IGNORE_INDEX):
    C = inputs.shape[-1]
    x = inputs.reshape(-1, C).astype(jnp.float32)
    t = targets.reshape(-1).astype(jnp.int32)
    mask = t != ignore_index
    logp = jax.nn.log_softmax(x, axis=-1)
    safe_t = jnp.where(mask, t, 0)
    ce = -jnp.take_along_axis(logp, safe_t[:, None], axis=-1)[:, 0]
    pt = jnp.exp(-ce)
    fl = alpha * (1.0 - pt) ** gamma * ce
    fl = jnp.where(mask, fl, 0.0)
    return jnp.sum(fl) / jnp.maximum(jnp.sum(mask.astype(jnp.float32)), 1.0)


if __name__ == "__main__":
    key = jax.random.PRNGKey(0)

    def make_case(k, shape, C, dtype, p_ignore=0.25):
        k_x, k_t, k_i = jax.random.split(k, 3)
        logits = jax.random.normal(k_x, shape + (C,), dtype=jnp.float32).astype(dtype)
        tgts = jax.random.randint(k_t, shape, 0, C, dtype=jnp.int32)
        ignore = jax.random.bernoulli(k_i, p_ignore, shape)
        tgts = jnp.where(ignore, IGNORE_INDEX, tgts)
        return logits, tgts

    k1, k2, k3, k4 = jax.random.split(key, 4)
    cases = [
        # (name, logits, targets)
        ("f32_C32_packed",    *make_case(k1, (4, 40), 32, jnp.float32)),   # k=4, exact pack
        ("f32_C20_ragged",    *make_case(k2, (3, 7), 20, jnp.float32)),    # k=6, JAX tail rows
        ("bf16_C32_tail",     *make_case(k3, (5, 41), 32, jnp.bfloat16)),  # k=4, bf16, tail
        ("f32_C160_unpacked", *make_case(k4, (2, 8), 160, jnp.float32)),   # k=1 path
    ]

    for name, logits, tgts in cases:
        loss = jax.block_until_ready(focal_loss(logits, tgts))
        ref = _focal_loss_ref(logits, tgts)
        assert jnp.allclose(loss, ref, rtol=1e-3, atol=1e-5), (name, float(loss), float(ref))

    print("KERNEL_OK")
</pallas_src>

<mosaic_0001>
module attributes {stable_mosaic.version = 11 : i64} {
  func.func @_focal_loss_kernel(%arg0: i32, %arg1: memref<24x128xf32, #tpu.memory_space<vmem>>, %arg2: memref<24x4xi32, #tpu.memory_space<vmem>>, %arg3: memref<1x8x128xf32, #tpu.memory_space<vmem>>) attributes {dimension_semantics = [#tpu.dimension_semantics<parallel>], iteration_bounds = array<i64: 2>, scalar_prefetch = 0 : i64, scratch_operands = 0 : i64, tpu.core_type = #tpu.core_type<tc>, window_params = [{transform_indices = @transform_0, window_bounds = array<i64: 24, 128>}, {transform_indices = @transform_1, window_bounds = array<i64: 24, 4>}, {transform_indices = @transform_2, window_bounds = array<i64: 1, 8, 128>}]} {
    %c0 = arith.constant 0 : index
    %c0_0 = arith.constant 0 : index
    %0 = vector.load %arg1[%c0, %c0_0] : memref<24x128xf32, #tpu.memory_space<vmem>>, vector<24x128xf32>
    %c0_1 = arith.constant 0 : index
    %c0_2 = arith.constant 0 : index
    %1 = vector.load %arg2[%c0_1, %c0_2] : memref<24x4xi32, #tpu.memory_space<vmem>>, vector<24x4xi32>
    %c24_i32 = arith.constant 24 : i32
    %2 = arith.muli %arg0, %c24_i32 : i32
    %3 = tpu.iota {dimensions = array<i32: 0>} : vector<24x4xi32>
    %4 = vector.broadcast %2 : i32 to vector<24x4xi32>
    %5 = arith.addi %4, %3 : vector<24x4xi32>
    %c40_i32 = arith.constant 40 : i32
    %6 = vector.broadcast %c40_i32 : i32 to vector<24x4xi32>
    %7 = arith.cmpi slt, %5, %6 : vector<24x4xi32>
    %c-1_i32 = arith.constant -1 : i32
    %8 = vector.broadcast %c-1_i32 : i32 to vector<24x4xi32>
    %9 = arith.cmpi ne, %1, %8 : vector<24x4xi32>
    %10 = arith.andi %7, %9 : vector<24x4xi1>
    %c0_i32 = arith.constant 0 : i32
    %11 = vector.broadcast %c0_i32 : i32 to vector<24x4xi32>
    %12 = arith.select %10, %1, %11 : vector<24x4xi1>, vector<24x4xi32>
    %13 = tpu.iota {dimensions = array<i32: 1>} : vector<24x128xi32>
    %cst = arith.constant 0.000000e+00 : f32
    %14 = vector.broadcast %cst : f32 to vector<24x128xf32>
    %c0_i32_3 = arith.constant 0 : i32
    %15 = vector.broadcast %c0_i32_3 : i32 to vector<24x128xi32>
    %16 = arith.cmpi sge, %13, %15 : vector<24x128xi32>
    %c32_i32 = arith.constant 32 : i32
    %17 = vector.broadcast %c32_i32 : i32 to vector<24x128xi32>
    %18 = arith.cmpi slt, %13, %17 : vector<24x128xi32>
    %19 = arith.andi %16, %18 : vector<24x128xi1>
    %cst_4 = arith.constant 0xFF800000 : f32
    %20 = vector.broadcast %cst_4 : f32 to vector<24x128xf32>
    %21 = arith.select %19, %0, %20 : vector<24x128xi1>, vector<24x128xf32>
    %cst_5 = arith.constant dense<0xFF800000> : vector<24xf32>
    %22 = vector.multi_reduction <maximumf>, %21, %cst_5 [1] : vector<24x128xf32> to vector<24xf32>
    %23 = vector.shape_cast %22 : vector<24xf32> to vector<24x1xf32>
    %24 = vector.shape_cast %23 : vector<24x1xf32> to vector<24x1xf32>
    %25 = vector.broadcast %24 : vector<24x1xf32> to vector<24x128xf32>
    %26 = arith.select %19, %25, %14 : vector<24x128xi1>, vector<24x128xf32>
    %c32_i32_6 = arith.constant 32 : i32
    %27 = vector.broadcast %c32_i32_6 : i32 to vector<24x128xi32>
    %28 = arith.cmpi sge, %13, %27 : vector<24x128xi32>
    %c64_i32 = arith.constant 64 : i32
    %29 = vector.broadcast %c64_i32 : i32 to vector<24x128xi32>
    %30 = arith.cmpi slt, %13, %29 : vector<24x128xi32>
    %31 = arith.andi %28, %30 : vector<24x128xi1>
    %cst_7 = arith.constant 0xFF800000 : f32
    %32 = vector.broadcast %cst_7 : f32 to vector<24x128xf32>
    %33 = arith.select %31, %0, %32 : vector<24x128xi1>, vector<24x128xf32>
    %cst_8 = arith.constant dense<0xFF800000> : vector<24xf32>
    %34 = vector.multi_reduction <maximumf>, %33, %cst_8 [1] : vector<24x128xf32> to vector<24xf32>
    %35 = vector.shape_cast %34 : vector<24xf32> to vector<24x1xf32>
    %36 = vector.shape_cast %35 : vector<24x1xf32> to vector<24x1xf32>
    %37 = vector.broadcast %36 : vector<24x1xf32> to vector<24x128xf32>
    %38 = arith.select %31, %37, %26 : vector<24x128xi1>, vector<24x128xf32>
    %c64_i32_9 = arith.constant 64 : i32
    %39 = vector.broadcast %c64_i32_9 : i32 to vector<24x128xi32>
    %40 = arith.cmpi sge, %13, %39 : vector<24x128xi32>
    %c96_i32 = arith.constant 96 : i32
    %41 = vector.broadcast %c96_i32 : i32 to vector<24x128xi32>
    %42 = arith.cmpi slt, %13, %41 : vector<24x128xi32>
    %43 = arith.andi %40, %42 : vector<24x128xi1>
    %cst_10 = arith.constant 0xFF800000 : f32
    %44 = vector.broadcast %cst_10 : f32 to vector<24x128xf32>
    %45 = arith.select %43, %0, %44 : vector<24x128xi1>, vector<24x128xf32>
    %cst_11 = arith.constant dense<0xFF800000> : vector<24xf32>
    %46 = vector.multi_reduction <maximumf>, %45, %cst_11 [1] : vector<24x128xf32> to vector<24xf32>
    %47 = vector.shape_cast %46 : vector<24xf32> to vector<24x1xf32>
    %48 = vector.shape_cast %47 : vector<24x1xf32> to vector<24x1xf32>
    %49 = vector.broadcast %48 : vector<24x1xf32> to vector<24x128xf32>
    %50 = arith.select %43, %49, %38 : vector<24x128xi1>, vector<24x128xf32>
    %c96_i32_12 = arith.constant 96 : i32
    %51 = vector.broadcast %c96_i32_12 : i32 to vector<24x128xi32>
    %52 = arith.cmpi sge, %13, %51 : vector<24x128xi32>
    %c128_i32 = arith.constant 128 : i32
    %53 = vector.broadcast %c128_i32 : i32 to vector<24x128xi32>
    %54 = arith.cmpi slt, %13, %53 : vector<24x128xi32>
    %55 = arith.andi %52, %54 : vector<24x128xi1>
    %cst_13 = arith.constant 0xFF800000 : f32
    %56 = vector.broadcast %cst_13 : f32 to vector<24x128xf32>
    %57 = arith.select %55, %0, %56 : vector<24x128xi1>, vector<24x128xf32>
    %cst_14 = arith.constant dense<0xFF800000> : vector<24xf32>
    %58 = vector.multi_reduction <maximumf>, %57, %cst_14 [1] : vector<24x128xf32> to vector<24xf32>
    %59 = vector.shape_cast %58 : vector<24xf32> to vector<24x1xf32>
    %60 = vector.shape_cast %59 : vector<24x1xf32> to vector<24x1xf32>
    %61 = vector.broadcast %60 : vector<24x1xf32> to vector<24x128xf32>
    %62 = arith.select %55, %61, %50 : vector<24x128xi1>, vector<24x128xf32>
    %63 = arith.subf %0, %62 : vector<24x128xf32>
    %64 = math.exp %63 : vector<24x128xf32>
    %65 = tpu.iota {dimensions = array<i32: 1>} : vector<24x4xi32>
    %c32_i32_15 = arith.constant 32 : i32
    %66 = vector.broadcast %c32_i32_15 : i32 to vector<24x4xi32>
    %67 = arith.muli %65, %66 : vector<24x4xi32>
    %68 = arith.addi %12, %67 : vector<24x4xi32>
    %cst_16 = arith.constant 0.000000e+00 : f32
    %69 = vector.broadcast %cst_16 : f32 to vector<24x4xf32>
    %cst_17 = arith.constant 0.000000e+00 : f32
    %70 = vector.broadcast %cst_17 : f32 to vector<24x4xf32>
    %c0_i32_18 = arith.constant 0 : i32
    %71 = vector.broadcast %c0_i32_18 : i32 to vector<24x128xi32>
    %72 = arith.cmpi sge, %13, %71 : vector<24x128xi32>
    %c32_i32_19 = arith.constant 32 : i32
    %73 = vector.broadcast %c32_i32_19 : i32 to vector<24x128xi32>
    %74 = arith.cmpi slt, %13, %73 : vector<24x128xi32>
    %75 = arith.andi %72, %74 : vector<24x128xi1>
    %cst_20 = arith.constant 0.000000e+00 : f32
    %76 = vector.broadcast %cst_20 : f32 to vector<24x128xf32>
    %77 = arith.select %75, %64, %76 : vector<24x128xi1>, vector<24x128xf32>
    %cst_21 = arith.constant dense<0.000000e+00> : vector<24xf32>
    %78 = vector.multi_reduction <add>, %77, %cst_21 [1] : vector<24x128xf32> to vector<24xf32>
    %79 = vector.shape_cast %78 : vector<24xf32> to vector<24x1xf32>
    %80 = vector.extract_strided_slice %68 {offsets = [0, 0], sizes = [24, 1], strides = [1, 1]} : vector<24x4xi32> to vector<24x1xi32>
    %81 = vector.broadcast %80 : vector<24x1xi32> to vector<24x128xi32>
    %82 = arith.cmpi eq, %13, %81 : vector<24x128xi32>
    %cst_22 = arith.constant 0.000000e+00 : f32
    %83 = vector.broadcast %cst_22 : f32 to vector<24x128xf32>
    %84 = arith.select %82, %63, %83 : vector<24x128xi1>, vector<24x128xf32>
    %cst_23 = arith.constant dense<0.000000e+00> : vector<24xf32>
    %85 = vector.multi_reduction <add>, %84, %cst_23 [1] : vector<24x128xf32> to vector<24xf32>
    %86 = vector.shape_cast %85 : vector<24xf32> to vector<24x1xf32>
    %c0_i32_24 = arith.constant 0 : i32
    %87 = vector.broadcast %c0_i32_24 : i32 to vector<24x4xi32>
    %88 = arith.cmpi eq, %65, %87 : vector<24x4xi32>
    %89 = vector.shape_cast %79 : vector<24x1xf32> to vector<24x1xf32>
    %90 = vector.broadcast %89 : vector<24x1xf32> to vector<24x4xf32>
    %91 = arith.select %88, %90, %69 : vector<24x4xi1>, vector<24x4xf32>
    %c0_i32_25 = arith.constant 0 : i32
    %92 = vector.broadcast %c0_i32_25 : i32 to vector<24x4xi32>
    %93 = arith.cmpi eq, %65, %92 : vector<24x4xi32>
    %94 = vector.shape_cast %86 : vector<24x1xf32> to vector<24x1xf32>
    %95 = vector.broadcast %94 : vector<24x1xf32> to vector<24x4xf32>
    %96 = arith.select %93, %95, %70 : vector<24x4xi1>, vector<24x4xf32>
    %c32_i32_26 = arith.constant 32 : i32
    %97 = vector.broadcast %c32_i32_26 : i32 to vector<24x128xi32>
    %98 = arith.cmpi sge, %13, %97 : vector<24x128xi32>
    %c64_i32_27 = arith.constant 64 : i32
    %99 = vector.broadcast %c64_i32_27 : i32 to vector<24x128xi32>
    %100 = arith.cmpi slt, %13, %99 : vector<24x128xi32>
    %101 = arith.andi %98, %100 : vector<24x128xi1>
    %cst_28 = arith.constant 0.000000e+00 : f32
    %102 = vector.broadcast %cst_28 : f32 to vector<24x128xf32>
    %103 = arith.select %101, %64, %102 : vector<24x128xi1>, vector<24x128xf32>
    %cst_29 = arith.constant dense<0.000000e+00> : vector<24xf32>
    %104 = vector.multi_reduction <add>, %103, %cst_29 [1] : vector<24x128xf32> to vector<24xf32>
    %105 = vector.shape_cast %104 : vector<24xf32> to vector<24x1xf32>
    %106 = vector.extract_strided_slice %68 {offsets = [0, 1], sizes = [24, 1], strides = [1, 1]} : vector<24x4xi32> to vector<24x1xi32>
    %107 = vector.broadcast %106 : vector<24x1xi32> to vector<24x128xi32>
    %108 = arith.cmpi eq, %13, %107 : vector<24x128xi32>
    %cst_30 = arith.constant 0.000000e+00 : f32
    %109 = vector.broadcast %cst_30 : f32 to vector<24x128xf32>
    %110 = arith.select %108, %63, %109 : vector<24x128xi1>, vector<24x128xf32>
    %cst_31 = arith.constant dense<0.000000e+00> : vector<24xf32>
    %111 = vector.multi_reduction <add>, %110, %cst_31 [1] : vector<24x128xf32> to vector<24xf32>
    %112 = vector.shape_cast %111 : vector<24xf32> to vector<24x1xf32>
    %c1_i32 = arith.constant 1 : i32
    %113 = vector.broadcast %c1_i32 : i32 to vector<24x4xi32>
    %114 = arith.cmpi eq, %65, %113 : vector<24x4xi32>
    %115 = vector.shape_cast %105 : vector<24x1xf32> to vector<24x1xf32>
    %116 = vector.broadcast %115 : vector<24x1xf32> to vector<24x4xf32>
    %117 = arith.select %114, %116, %91 : vector<24x4xi1>, vector<24x4xf32>
    %c1_i32_32 = arith.constant 1 : i32
    %118 = vector.broadcast %c1_i32_32 : i32 to vector<24x4xi32>
    %119 = arith.cmpi eq, %65, %118 : vector<24x4xi32>
    %120 = vector.shape_cast %112 : vector<24x1xf32> to vector<24x1xf32>
    %121 = vector.broadcast %120 : vector<24x1xf32> to vector<24x4xf32>
    %122 = arith.select %119, %121, %96 : vector<24x4xi1>, vector<24x4xf32>
    %c64_i32_33 = arith.constant 64 : i32
    %123 = vector.broadcast %c64_i32_33 : i32 to vector<24x128xi32>
    %124 = arith.cmpi sge, %13, %123 : vector<24x128xi32>
    %c96_i32_34 = arith.constant 96 : i32
    %125 = vector.broadcast %c96_i32_34 : i32 to vector<24x128xi32>
    %126 = arith.cmpi slt, %13, %125 : vector<24x128xi32>
    %127 = arith.andi %124, %126 : vector<24x128xi1>
    %cst_35 = arith.constant 0.000000e+00 : f32
    %128 = vector.broadcast %cst_35 : f32 to vector<24x128xf32>
    %129 = arith.select %127, %64, %128 : vector<24x128xi1>, vector<24x128xf32>
    %cst_36 = arith.constant dense<0.000000e+00> : vector<24xf32>
    %130 = vector.multi_reduction <add>, %129, %cst_36 [1] : vector<24x128xf32> to vector<24xf32>
    %131 = vector.shape_cast %130 : vector<24xf32> to vector<24x1xf32>
    %132 = vector.extract_strided_slice %68 {offsets = [0, 2], sizes = [24, 1], strides = [1, 1]} : vector<24x4xi32> to vector<24x1xi32>
    %133 = vector.broadcast %132 : vector<24x1xi32> to vector<24x128xi32>
    %134 = arith.cmpi eq, %13, %133 : vector<24x128xi32>
    %cst_37 = arith.constant 0.000000e+00 : f32
    %135 = vector.broadcast %cst_37 : f32 to vector<24x128xf32>
    %136 = arith.select %134, %63, %135 : vector<24x128xi1>, vector<24x128xf32>
    %cst_38 = arith.constant dense<0.000000e+00> : vector<24xf32>
    %137 = vector.multi_reduction <add>, %136, %cst_38 [1] : vector<24x128xf32> to vector<24xf32>
    %138 = vector.shape_cast %137 : vector<24xf32> to vector<24x1xf32>
    %c2_i32 = arith.constant 2 : i32
    %139 = vector.broadcast %c2_i32 : i32 to vector<24x4xi32>
    %140 = arith.cmpi eq, %65, %139 : vector<24x4xi32>
    %141 = vector.shape_cast %131 : vector<24x1xf32> to vector<24x1xf32>
    %142 = vector.broadcast %141 : vector<24x1xf32> to vector<24x4xf32>
    %143 = arith.select %140, %142, %117 : vector<24x4xi1>, vector<24x4xf32>
    %c2_i32_39 = arith.constant 2 : i32
    %144 = vector.broadcast %c2_i32_39 : i32 to vector<24x4xi32>
    %145 = arith.cmpi eq, %65, %144 : vector<24x4xi32>
    %146 = vector.shape_cast %138 : vector<24x1xf32> to vector<24x1xf32>
    %147 = vector.broadcast %146 : vector<24x1xf32> to vector<24x4xf32>
    %148 = arith.select %145, %147, %122 : vector<24x4xi1>, vector<24x4xf32>
    %c96_i32_40 = arith.constant 96 : i32
    %149 = vector.broadcast %c96_i32_40 : i32 to vector<24x128xi32>
    %150 = arith.cmpi sge, %13, %149 : vector<24x128xi32>
    %c128_i32_41 = arith.constant 128 : i32
    %151 = vector.broadcast %c128_i32_41 : i32 to vector<24x128xi32>
    %152 = arith.cmpi slt, %13, %151 : vector<24x128xi32>
    %153 = arith.andi %150, %152 : vector<24x128xi1>
    %cst_42 = arith.constant 0.000000e+00 : f32
    %154 = vector.broadcast %cst_42 : f32 to vector<24x128xf32>
    %155 = arith.select %153, %64, %154 : vector<24x128xi1>, vector<24x128xf32>
    %cst_43 = arith.constant dense<0.000000e+00> : vector<24xf32>
    %156 = vector.multi_reduction <add>, %155, %cst_43 [1] : vector<24x128xf32> to vector<24xf32>
    %157 = vector.shape_cast %156 : vector<24xf32> to vector<24x1xf32>
    %158 = vector.extract_strided_slice %68 {offsets = [0, 3], sizes = [24, 1], strides = [1, 1]} : vector<24x4xi32> to vector<24x1xi32>
    %159 = vector.broadcast %158 : vector<24x1xi32> to vector<24x128xi32>
    %160 = arith.cmpi eq, %13, %159 : vector<24x128xi32>
    %cst_44 = arith.constant 0.000000e+00 : f32
    %161 = vector.broadcast %cst_44 : f32 to vector<24x128xf32>
    %162 = arith.select %160, %63, %161 : vector<24x128xi1>, vector<24x128xf32>
    %cst_45 = arith.constant dense<0.000000e+00> : vector<24xf32>
    %163 = vector.multi_reduction <add>, %162, %cst_45 [1] : vector<24x128xf32> to vector<24xf32>
    %164 = vector.shape_cast %163 : vector<24xf32> to vector<24x1xf32>
    %c3_i32 = arith.constant 3 : i32
    %165 = vector.broadcast %c3_i32 : i32 to vector<24x4xi32>
    %166 = arith.cmpi eq, %65, %165 : vector<24x4xi32>
    %167 = vector.shape_cast %157 : vector<24x1xf32> to vector<24x1xf32>
    %168 = vector.broadcast %167 : vector<24x1xf32> to vector<24x4xf32>
    %169 = arith.select %166, %168, %143 : vector<24x4xi1>, vector<24x4xf32>
    %c3_i32_46 = arith.constant 3 : i32
    %170 = vector.broadcast %c3_i32_46 : i32 to vector<24x4xi32>
    %171 = arith.cmpi eq, %65, %170 : vector<24x4xi32>
    %172 = vector.shape_cast %164 : vector<24x1xf32> to vector<24x1xf32>
    %173 = vector.broadcast %172 : vector<24x1xf32> to vector<24x4xf32>
    %174 = arith.select %171, %173, %148 : vector<24x4xi1>, vector<24x4xf32>
    %175 = math.log %169 : vector<24x4xf32>
    %176 = arith.subf %175, %174 : vector<24x4xf32>
    %cst_47 = arith.constant 0.000000e+00 : f32
    %177 = vector.broadcast %cst_47 : f32 to vector<24x4xf32>
    %178 = arith.subf %177, %176 : vector<24x4xf32>
    %179 = math.exp %178 : vector<24x4xf32>
    %cst_48 = arith.constant 1.000000e+00 : f32
    %180 = vector.broadcast %cst_48 : f32 to vector<24x4xf32>
    %181 = arith.subf %180, %179 : vector<24x4xf32>
    %182 = arith.mulf %181, %181 : vector<24x4xf32>
    %183 = arith.mulf %182, %176 : vector<24x4xf32>
    %cst_49 = arith.constant 0.000000e+00 : f32
    %184 = vector.broadcast %cst_49 : f32 to vector<24x4xf32>
    %185 = arith.select %10, %183, %184 : vector<24x4xi1>, vector<24x4xf32>
    %186 = vector.shape_cast %185 : vector<24x4xf32> to vector<1x24x4xf32>
    %cst_50 = arith.constant dense<0.000000e+00> : vector<1xf32>
    %187 = vector.multi_reduction <add>, %186, %cst_50 [1, 2] : vector<1x24x4xf32> to vector<1xf32>
    %188 = vector.shape_cast %187 : vector<1xf32> to vector<1x1x1xf32>
    %189 = vector.extract %188[0, 0, 0] : f32 from vector<1x1x1xf32>
    %190 = arith.extui %10 : vector<24x4xi1> to vector<24x4xi32>
    %191 = arith.sitofp %190 : vector<24x4xi32> to vector<24x4xf32>
    %192 = vector.shape_cast %191 : vector<24x4xf32> to vector<1x24x4xf32>
    %cst_51 = arith.constant dense<0.000000e+00> : vector<1xf32>
    %193 = vector.multi_reduction <add>, %192, %cst_51 [1, 2] : vector<1x24x4xf32> to vector<1xf32>
    %194 = vector.shape_cast %193 : vector<1xf32> to vector<1x1x1xf32>
    %195 = vector.extract %194[0, 0, 0] : f32 from vector<1x1x1xf32>
    %196 = tpu.iota {dimensions = array<i32: 2>} : vector<1x8x128xi32>
    %c0_i32_52 = arith.constant 0 : i32
    %197 = vector.broadcast %c0_i32_52 : i32 to vector<1x8x128xi32>
    %198 = arith.cmpi eq, %196, %197 : vector<1x8x128xi32>
    %c1_i32_53 = arith.constant 1 : i32
    %199 = vector.broadcast %c1_i32_53 : i32 to vector<1x8x128xi32>
    %200 = arith.cmpi eq, %196, %199 : vector<1x8x128xi32>
    %cst_54 = arith.constant 0.000000e+00 : f32
    %201 = vector.broadcast %195 : f32 to vector<1x8x128xf32>
    %202 = vector.broadcast %cst_54 : f32 to vector<1x8x128xf32>
    %203 = arith.select %200, %201, %202 : vector<1x8x128xi1>, vector<1x8x128xf32>
    %204 = vector.broadcast %189 : f32 to vector<1x8x128xf32>
    %205 = arith.select %198, %204, %203 : vector<1x8x128xi1>, vector<1x8x128xf32>
    %c0_55 = arith.constant 0 : index
    %c0_56 = arith.constant 0 : index
    %c0_57 = arith.constant 0 : index
    %206 = vector.load %arg3[%c0_55, %c0_56, %c0_57] : memref<1x8x128xf32, #tpu.memory_space<vmem>>, vector<1x8x128xf32>
    tpu.vector_store %arg3[%c0_55, %c0_56, %c0_57], %205 {strides = array<i32>} : memref<1x8x128xf32, #tpu.memory_space<vmem>>, vector<1x8x128xf32>,
    return
  }
  func.func @transform_0(%arg0: i32) -> (i32, i32) {
    %c0_i32 = arith.constant 0 : i32
    %c0_i32_0 = arith.constant 0 : i32
    return %arg0, %c0_i32 : i32, i32
  }
  func.func @transform_1(%arg0: i32) -> (i32, i32) {
    %c0_i32 = arith.constant 0 : i32
    %c0_i32_0 = arith.constant 0 : i32
    return %arg0, %c0_i32 : i32, i32
  }
  func.func @transform_2(%arg0: i32) -> (i32, i32, i32) {
    %c0_i32 = arith.constant 0 : i32
    %c0_i32_0 = arith.constant 0 : i32
    %c0_i32_1 = arith.constant 0 : i32
    return %arg0, %c0_i32, %c0_i32_0 : i32, i32, i32
  }
}

</mosaic_0001>

<llo_original>
// kernel: tpu_custom_call.1
$region0: #{tpu_custom_call.1}
  #allocation0 [shape = 'u32[]', space=smem, size = 0x4, offset = 0x4, fixed_abs, tag = 'smem constant byte address 0x4 - core index']
  #allocation1 [shape = 'u32[72,128]{1,0:T(1,128)}', space=vmem, size = 0x9000, scoped, tag = 'internal scratch']
  %s0 = inlined_call_operand.vmem [shape: f32[40,128], index: 0, kind: input, shape index: {}]
  %s1 = inlined_call_operand.vmem [shape: s32[40,4], index: 1, kind: input, shape index: {}]
  %s2 = inlined_call_operand.hbm [shape: f32[2,8,128], index: 2, kind: output, shape index: {}]
  %s3 = sld [smem:[#allocation0]]
  $region41: #{tpu_custom_call.1} parent=0
    _
  %s5 = ssub.s32 1, %s3
  %s6 = scalar_select 0, %s5, %s3
  $region1: #{tpu_custom_call.1} parent=0
    #allocation2 [shape = 'u8[8192]{0}', space=vmem, size = 0x2000, scoped, tag = 'output window, operand 0']
    #allocation3 [shape = 's32[2]{0}', space=sflag, size = 0x8, scoped, tag = 'scoped memory for tpu_custom_call.1']
    %7 = vsyncpa [#allocation3], 0
    %s8 = scalar_lea.sflag [#allocation3], 1
    %9 = vsyncpa %s8, 0
    loop: start=0, step=1, limit=4
    $region2: #{tpu_custom_call.1} parent=1 // loop_pre_header
      _
    $region3: #{tpu_custom_call.1} parent=1 // loop_header
      %s11 = sphi 0, %s15
      %p12 = scmp.ge.s32.totalorder %s11, 4
      %s21 = sphi 0, %s23
      %s24 = sphi 0, %s21
      %s25 = sphi 0, %s24
      %s41 = sphi 0, %s25
      %s47 = sphi 0, %s49
      %s50 = sphi 0, %s47
      %s51 = sphi 0, %s50
      %s67 = sphi 0, %s51
      %s73 = sphi 0, %s75
      %s76 = sphi 0, %s73
      %s77 = sphi 0, %s76
      %s93 = sphi 0, %s77
    $region4: #{tpu_custom_call.1} parent=1 // loop_header_branch
      %14 = sbr.rel (%p12) target = $region8
    $region5: #{tpu_custom_call.1} parent=1 // loop_body
      %s16 = ssub.s32 %s11, 1
      %s17 = ssub.s32 %s11, 2
      %s18 = sadd.s32 %s11, 1
      %s19 = ssub.s32 %s11, %s18
      %p20 = scmp.eq.s32.totalorder %s19, 0
      %s22 = sadd.s32 %s21, 1
      %s23 = scalar_select %p20, %s21, %s22
      %p26 = pneg %p20
      %p27 = scmp.eq.s32.totalorder %s11, 1
      %p28 = por %p26, %p27
      %p29 = scmp.ne.s32.totalorder %s21, %s24
      %p30 = scmp.eq.s32.totalorder %s11, 0
      %p31 = por %p29, %p30
      %p32 = scmp.ne.s32.totalorder %s21, %s24
      %p33 = scmp.eq.s32.totalorder %s16, 1
      %p34 = por %p32, %p33
      %p35 = scmp.ne.s32.totalorder %s24, %s25
      %p36 = scmp.eq.s32.totalorder %s16, 0
      %p37 = por %p35, %p36
      %p38 = scmp.ne.s32.totalorder %s24, %s25
      %p39 = scmp.eq.s32.totalorder %s17, 1
      %p40 = por %p38, %p39
      %p42 = scmp.ne.s32.totalorder %s25, %s41
      %p43 = scmp.eq.s32.totalorder %s17, 0
      %p44 = por %p42, %p43
      %s45 = ssub.s32 %s11, %s18
      %p46 = scmp.eq.s32.totalorder %s45, 0
      %s48 = sadd.s32 %s47, 1
      %s49 = scalar_select %p46, %s47, %s48
      %p52 = pneg %p46
      %p53 = scmp.eq.s32.totalorder %s11, 1
      %p54 = por %p52, %p53
      %p55 = scmp.ne.s32.totalorder %s47, %s50
      %p56 = scmp.eq.s32.totalorder %s11, 0
      %p57 = por %p55, %p56
      %p58 = scmp.ne.s32.totalorder %s47, %s50
      %p59 = scmp.eq.s32.totalorder %s16, 1
      %p60 = por %p58, %p59
      %p61 = scmp.ne.s32.totalorder %s50, %s51
      %p62 = scmp.eq.s32.totalorder %s16, 0
      %p63 = por %p61, %p62
      %p64 = scmp.ne.s32.totalorder %s50, %s51
      %p65 = scmp.eq.s32.totalorder %s17, 1
      %p66 = por %p64, %p65
      %p68 = scmp.ne.s32.totalorder %s51, %s67
      %p69 = scmp.eq.s32.totalorder %s17, 0
      %p70 = por %p68, %p69
      %s71 = ssub.s32 %s11, %s18
      %p72 = scmp.eq.s32.totalorder %s71, 0
      %s74 = sadd.s32 %s73, 1
      %s75 = scalar_select %p72, %s73, %s74
      %p78 = pneg %p72
      %p79 = scmp.eq.s32.totalorder %s11, 1
      %p80 = por %p78, %p79
      %p81 = scmp.ne.s32.totalorder %s73, %s76
      %p82 = scmp.eq.s32.totalorder %s11, 0
      %p83 = por %p81, %p82
      %p84 = scmp.ne.s32.totalorder %s73, %s76
      %p85 = scmp.eq.s32.totalorder %s16, 1
      %p86 = por %p84, %p85
      %p87 = scmp.ne.s32.totalorder %s76, %s77
      %p88 = scmp.eq.s32.totalorder %s16, 0
      %p89 = por %p87, %p88
      %p90 = scmp.ne.s32.totalorder %s76, %s77
      %p91 = scmp.eq.s32.totalorder %s17, 1
      %p92 = por %p90, %p91
      %p94 = scmp.ne.s32.totalorder %s77, %s93
      %p95 = scmp.eq.s32.totalorder %s17, 0
      %p96 = por %p94, %p95
      %p97 = scmp.le.s32.totalorder 1, %s11
      %p98 = scmp.lt.s32.totalorder %s11, 3
      %p99 = pnand %p97, %p98
      %p100 = pneg %p99
      // Predicated region
      $region9: #{tpu_custom_call.1} parent=5 // pred_check
        _
      $region10: #{tpu_custom_call.1} parent=5 // pred_check_branch
        %102 = sbr.rel (%p99) target = $region12
      $region11: #{tpu_custom_call.1} parent=5 // pred_region
        %s103 = ssub.s32 %s11, 1
      $region12: #{tpu_custom_call.1} parent=5 // pred_fallthru
        _
      %p104 = scmp.lt.s32.totalorder %s11, 2
      // Predicated region
      $region13: #{tpu_custom_call.1} parent=5 // pred_check
        %p105 = pneg %p104
      $region14: #{tpu_custom_call.1} parent=5 // pred_check_branch
        %107 = sbr.rel (%p105) target = $region16
      $region15: #{tpu_custom_call.1} parent=5 // pred_region
        // Predicated region
        $region17: #{tpu_custom_call.1} parent=15 // pred_check
          %p108 = pneg %p31
        $region18: #{tpu_custom_call.1} parent=15 // pred_check_branch
          %110 = sbr.rel (%p108) target = $region20
        $region19: #{tpu_custom_call.1} parent=15 // pred_region
          %s111 = smul.u32 3, %s11
          %s112 = ssub.s32 5, %s111
          %p113 = scmp.lt.s32.totalorder %s112, 3
          %s114 = scalar_select %p113, %s112, 3
          %s115 = smul.u32 8, %s114
          %p116 = scmp.lt.s32.totalorder %s111, 4
          %s117 = scalar_select %p116, %s111, 4
          %s118 = smul.addr %s117, 8
          %s119 = scalar_lea.vmem %s0, %s118
          %s120 = smul.u32 3, %s11
          %s121 = ssub.s32 5, %s120
          %p122 = scmp.lt.s32.totalorder %s121, 3
          %s123 = scalar_select %p122, %s121, 3
          %s124 = smul.u32 8, %s123
        $region20: #{tpu_custom_call.1} parent=15 // pred_fallthru
          _
        // Predicated region
        $region21: #{tpu_custom_call.1} parent=15 // pred_check
          %p125 = pneg %p57
        $region22: #{tpu_custom_call.1} parent=15 // pred_check_branch
          %127 = sbr.rel (%p125) target = $region24
        $region23: #{tpu_custom_call.1} parent=15 // pred_region
          %s128 = smul.u32 3, %s11
          %s129 = ssub.s32 5, %s128
          %p130 = scmp.lt.s32.totalorder %s129, 3
          %s131 = scalar_select %p130, %s129, 3
          %s132 = smul.u32 8, %s131
          %p133 = scmp.lt.s32.totalorder %s128, 4
          %s134 = scalar_select %p133, %s128, 4
          %s135 = smul.addr %s134, 8
          %s136 = scalar_lea.vmem %s1, %s135
          %s137 = smul.u32 3, %s11
          %s138 = ssub.s32 5, %s137
          %p139 = scmp.lt.s32.totalorder %s138, 3
          %s140 = scalar_select %p139, %s138, 3
          %s141 = smul.u32 8, %s140
        $region24: #{tpu_custom_call.1} parent=15 // pred_fallthru
          _
      $region16: #{tpu_custom_call.1} parent=5 // pred_fallthru
        _
      %p142 = scmp.le.s32.totalorder 1, %s11
      %p143 = scmp.lt.s32.totalorder %s11, 3
      %p144 = pnand %p142, %p143
      %p145 = pneg %p144
      // Predicated region
      $region25: #{tpu_custom_call.1} parent=5 // pred_check
        _
      $region26: #{tpu_custom_call.1} parent=5 // pred_check_branch
        %147 = sbr.rel (%p144) target = $region28
      $region27: #{tpu_custom_call.1} parent=5 // pred_region
        %s148 = ssub.s32 %s11, 1
        %s149 = smul.u32 3, %s16
        %s150 = ssub.s32 5, %s149
        %p151 = scmp.lt.s32.totalorder %s150, 3
        %s152 = scalar_select %p151, %s150, 3
        %s153 = smul.u32 8, %s152
        %p154 = scmp.lt.s32.totalorder %s149, 4
        %s155 = scalar_select %p154, %s149, 4
        %s156 = smul.addr %s155, 8
        %s157 = scalar_lea.vmem %s0, %s156
        %p158 = pneg %p37
        %p159 = pneg %p34
        %s160 = smul.u32 3, %s16
        %s161 = ssub.s32 5, %s160
        %p162 = scmp.lt.s32.totalorder %s161, 3
        %s163 = scalar_select %p162, %s161, 3
        %s164 = smul.u32 8, %s163
        %p165 = scmp.lt.s32.totalorder %s160, 4
        %s166 = scalar_select %p165, %s160, 4
        %s167 = smul.addr %s166, 8
        %s168 = scalar_lea.vmem %s1, %s167
        %p169 = pneg %p63
        %p170 = pneg %p60
        %p171 = pneg %p89
        %p172 = pneg %p86
        %s173 = sand.u32 %s76, 1
        %s174 = scalar_lea.sflag [#allocation3], %s173
        %s175 = sand.u32 %s76, 1
        %s176 = smul.addr %s175, 8
        %s177 = scalar_lea.vmem [#allocation2], %s176
        %s178 = smul.u32 3, %s16
        %s179 = ssub.s32 5, %s178
        %p180 = scmp.lt.s32.totalorder %s179, 3
        %s181 = scalar_select %p180, %s179, 3
        %s182 = smul.u32 8, %s181
        %p183 = scmp.lt.s32.totalorder %s178, 4
        %s184 = scalar_select %p183, %s178, 4
        %s185 = smul.addr %s184, 8
        %s186 = scalar_lea.vmem %s0, %s185
        %s187 = smul.u32 3, %s16
        %s188 = ssub.s32 5, %s187
        %p189 = scmp.lt.s32.totalorder %s188, 3
        %s190 = scalar_select %p189, %s188, 3
        %s191 = smul.u32 8, %s190
        %s192 = smul.u32 3, %s16
        %s193 = ssub.s32 5, %s192
        %p194 = scmp.lt.s32.totalorder %s193, 3
        %s195 = scalar_select %p194, %s193, 3
        %s196 = smul.u32 8, %s195
        %p197 = scmp.lt.s32.totalorder %s192, 4
        %s198 = scalar_select %p197, %s192, 4
        %s199 = smul.addr %s198, 8
        %s200 = scalar_lea.vmem %s1, %s199
        %s201 = smul.u32 3, %s16
        %s202 = ssub.s32 5, %s201
        %p203 = scmp.lt.s32.totalorder %s202, 3
        %s204 = scalar_select %p203, %s202, 3
        %s205 = smul.u32 8, %s204
        %v206 = vld [vmem:[%s186] sm:$0xff]
        %v207 = vld [vmem:[%s186 + $0x8] sm:$0xff]
        %v208 = vld [vmem:[%s186 + $0x10] sm:$0xff]
        %v209 = vld [vmem:[%s200] sm:$0xff]
        %v210 = vld [vmem:[%s200 + $0x8] sm:$0xff]
        %v211 = vld [vmem:[%s200 + $0x10] sm:$0xff]
        %s212 = smul.u32 %s16, 24
        %v213 = vlaneseq
        %v214 = vshrl.u32 %v213, 7
        %v215 = vadd.s32 %v214, 8
        %v216 = vadd.s32 %v214, 16
        %v217 = vstv %s212
        %v218 = vadd.s32 %v217, %v214
        %v219 = vadd.s32 %v217, %v215
        %v220 = vadd.s32 %v217, %v216
        %vm221 = vcmp.lt.s32.totalorder %v218, 40
        %vm222 = vcmp.lt.s32.totalorder %v219, 40
        %vm223 = vcmp.lt.s32.totalorder %v220, 40
        %vm224 = vcmp.ne.s32.totalorder %v209, 4294967295
        %vm225 = vcmp.ne.s32.totalorder %v210, 4294967295
        %vm226 = vcmp.ne.s32.totalorder %v211, 4294967295
        %vm227 = vmand %vm221, %vm224
        %vm228 = vmand %vm222, %vm225
        %vm229 = vmand %vm223, %vm226
        %v230 = vsel %vm227, %v209, 0
        %v231 = vsel %vm228, %v210, 0
        %v232 = vsel %vm229, %v211, 0
        %v233 = vlaneseq
        %v234 = vand.u32 %v233, 127
        %vm235 = vcmp.ge.s32.totalorder %v234, 0
        %vm236 = vcmp.lt.s32.totalorder %v234, 32
        %vm237 = vmand %vm235, %vm236
        %v238 = vsel %vm237, %v206, -inf
        %v239 = vsel %vm237, %v207, -inf
        %v240 = vsel %vm237, %v208, -inf
        %241 = vmax.xlane.f32.xlu0 %v238
        %v242 = vpop.xlane.xlu0 %241
        %243 = vmax.xlane.f32.xlu0 %v239
        %v244 = vpop.xlane.xlu0 %243
        %245 = vmax.xlane.f32.xlu0 %v240
        %v246 = vpop.xlane.xlu0 %245
        %v247 = vsel %vm237, %v242, 0.0
        %v248 = vsel %vm237, %v244, 0.0
        %v249 = vsel %vm237, %v246, 0.0
        %vm250 = vcmp.ge.s32.totalorder %v234, 32
        %vm251 = vcmp.lt.s32.totalorder %v234, 64
        %vm252 = vmand %vm250, %vm251
        %v253 = vsel %vm252, %v206, -inf
        %v254 = vsel %vm252, %v207, -inf
        %v255 = vsel %vm252, %v208, -inf
        %256 = vmax.xlane.f32.xlu0 %v253
        %v257 = vpop.xlane.xlu0 %256
        %258 = vmax.xlane.f32.xlu0 %v254
        %v259 = vpop.xlane.xlu0 %258
        %260 = vmax.xlane.f32.xlu0 %v255
        %v261 = vpop.xlane.xlu0 %260
        %v262 = vsel %vm252, %v257, %v247
        %v263 = vsel %vm252, %v259, %v248
        %v264 = vsel %vm252, %v261, %v249
        %vm265 = vcmp.ge.s32.totalorder %v234, 64
        %vm266 = vcmp.lt.s32.totalorder %v234, 96
        %vm267 = vmand %vm265, %vm266
        %v268 = vsel %vm267, %v206, -inf
        %v269 = vsel %vm267, %v207, -inf
        %v270 = vsel %vm267, %v208, -inf
        %271 = vmax.xlane.f32.xlu0 %v268
        %v272 = vpop.xlane.xlu0 %271
        %273 = vmax.xlane.f32.xlu0 %v269
        %v274 = vpop.xlane.xlu0 %273
        %275 = vmax.xlane.f32.xlu0 %v270
        %v276 = vpop.xlane.xlu0 %275
        %v277 = vsel %vm267, %v272, %v262
        %v278 = vsel %vm267, %v274, %v263
        %v279 = vsel %vm267, %v276, %v264
        %vm280 = vcmp.ge.s32.totalorder %v234, 96
        %vm281 = vcmp.lt.s32.totalorder %v234, 128
        %vm282 = vmand %vm280, %vm281
        %v283 = vsel %vm282, %v206, -inf
        %v284 = vsel %vm282, %v207, -inf
        %v285 = vsel %vm282, %v208, -inf
        %286 = vmax.xlane.f32.xlu0 %v283
        %v287 = vpop.xlane.xlu0 %286
        %288 = vmax.xlane.f32.xlu0 %v284
        %v289 = vpop.xlane.xlu0 %288
        %290 = vmax.xlane.f32.xlu0 %v285
        %v291 = vpop.xlane.xlu0 %290
        %v292 = vsel %vm282, %v287, %v277
        %v293 = vsel %vm282, %v289, %v278
        %v294 = vsel %vm282, %v291, %v279
        %v295 = vsub.f32 %v206, %v292
        %v296 = vsub.f32 %v207, %v293
        %v297 = vsub.f32 %v208, %v294
        %v298 = vmul.f32 %v295, 1.442695
        %v299 = vpow.pop %v298
        %v300 = vmul.f32 %v296, 1.442695
        %v301 = vpow.pop %v300
        %v302 = vmul.f32 %v297, 1.442695
        %v303 = vpow.pop %v302
        %v304 = vmul.u32 %v234, 32
        %v305 = vadd.s32 %v230, %v304
        %v306 = vadd.s32 %v231, %v304
        %v307 = vadd.s32 %v232, %v304
        %v308 = vsel %vm237, %v299, 0.0
        %v309 = vsel %vm237, %v301, 0.0
        %v310 = vsel %vm237, %v303, 0.0
        %311 = vadd.xlane.f32.xlu0 %v308
        %v312 = vpop.xlane.xlu0 %311
        %313 = vadd.xlane.f32.xlu0 %v309
        %v314 = vpop.xlane.xlu0 %313
        %315 = vadd.xlane.f32.xlu0 %v310
        %v316 = vpop.xlane.xlu0 %315
        %317 = vset.pattern.permute.xlu0 0
        %318 = vperm.xlu0 %317, %v305
        %v319 = vpop.permute.xlu0 %318
        %320 = vset.pattern.permute.xlu0 0
        %321 = vperm.xlu0 %320, %v306
        %v322 = vpop.permute.xlu0 %321
        %323 = vset.pattern.permute.xlu0 0
        %324 = vperm.xlu0 %323, %v307
        %v325 = vpop.permute.xlu0 %324
        %vm326 = vcmp.eq.s32.totalorder %v234, %v319
        %vm327 = vcmp.eq.s32.totalorder %v234, %v322
        %vm328 = vcmp.eq.s32.totalorder %v234, %v325
        %v329 = vsel %vm326, %v295, 0.0
        %v330 = vsel %vm327, %v296, 0.0
        %v331 = vsel %vm328, %v297, 0.0
        %332 = vadd.xlane.f32.xlu0 %v329
        %v333 = vpop.xlane.xlu0 %332
        %334 = vadd.xlane.f32.xlu0 %v330
        %v335 = vpop.xlane.xlu0 %334
        %336 = vadd.xlane.f32.xlu0 %v331
        %v337 = vpop.xlane.xlu0 %336
        %vm338 = vcmp.eq.s32.totalorder %v234, 0
        %v339 = vsel %vm338, %v312, 0.0
        %v340 = vsel %vm338, %v314, 0.0
        %v341 = vsel %vm338, %v316, 0.0
        %v342 = vsel %vm338, %v333, 0.0
        %v343 = vsel %vm338, %v335, 0.0
        %v344 = vsel %vm338, %v337, 0.0
        %v345 = vsel %vm252, %v299, 0.0
        %v346 = vsel %vm252, %v301, 0.0
        %v347 = vsel %vm252, %v303, 0.0
        %348 = vadd.xlane.f32.xlu0 %v345
        %v349 = vpop.xlane.xlu0 %348
        %350 = vadd.xlane.f32.xlu0 %v346
        %v351 = vpop.xlane.xlu0 %350
        %352 = vadd.xlane.f32.xlu0 %v347
        %v353 = vpop.xlane.xlu0 %352
        %354 = vset.pattern.permute.xlu0 1
        %355 = vperm.xlu0 %354, %v305
        %v356 = vpop.permute.xlu0 %355
        %357 = vset.pattern.permute.xlu0 1
        %358 = vperm.xlu0 %357, %v306
        %v359 = vpop.permute.xlu0 %358
        %360 = vset.pattern.permute.xlu0 1
        %361 = vperm.xlu0 %360, %v307
        %v362 = vpop.permute.xlu0 %361
        %vm363 = vcmp.eq.s32.totalorder %v234, %v356
        %vm364 = vcmp.eq.s32.totalorder %v234, %v359
        %vm365 = vcmp.eq.s32.totalorder %v234, %v362
        %v366 = vsel %vm363, %v295, 0.0
        %v367 = vsel %vm364, %v296, 0.0
        %v368 = vsel %vm365, %v297, 0.0
        %369 = vadd.xlane.f32.xlu0 %v366
        %v370 = vpop.xlane.xlu0 %369
        %371 = vadd.xlane.f32.xlu0 %v367
        %v372 = vpop.xlane.xlu0 %371
        %373 = vadd.xlane.f32.xlu0 %v368
        %v374 = vpop.xlane.xlu0 %373
        %vm375 = vcmp.eq.s32.totalorder %v234, 1
        %v376 = vsel %vm375, %v349, %v339
        %v377 = vsel %vm375, %v351, %v340
        %v378 = vsel %vm375, %v353, %v341
        %v379 = vsel %vm375, %v370, %v342
        %v380 = vsel %vm375, %v372, %v343
        %v381 = vsel %vm375, %v374, %v344
        %v382 = vsel %vm267, %v299, 0.0
        %v383 = vsel %vm267, %v301, 0.0
        %v384 = vsel %vm267, %v303, 0.0
        %385 = vadd.xlane.f32.xlu0 %v382
        %v386 = vpop.xlane.xlu0 %385
        %387 = vadd.xlane.f32.xlu0 %v383
        %v388 = vpop.xlane.xlu0 %387
        %389 = vadd.xlane.f32.xlu0 %v384
        %v390 = vpop.xlane.xlu0 %389
        %391 = vset.pattern.permute.xlu0 2
        %392 = vperm.xlu0 %391, %v305
        %v393 = vpop.permute.xlu0 %392
        %394 = vset.pattern.permute.xlu0 2
        %395 = vperm.xlu0 %394, %v306
        %v396 = vpop.permute.xlu0 %395
        %397 = vset.pattern.permute.xlu0 2
        %398 = vperm.xlu0 %397, %v307
        %v399 = vpop.permute.xlu0 %398
        %vm400 = vcmp.eq.s32.totalorder %v234, %v393
        %vm401 = vcmp.eq.s32.totalorder %v234, %v396
        %vm402 = vcmp.eq.s32.totalorder %v234, %v399
        %v403 = vsel %vm400, %v295, 0.0
        %v404 = vsel %vm401, %v296, 0.0
        %v405 = vsel %vm402, %v297, 0.0
        %406 = vadd.xlane.f32.xlu0 %v403
        %v407 = vpop.xlane.xlu0 %406
        %408 = vadd.xlane.f32.xlu0 %v404
        %v409 = vpop.xlane.xlu0 %408
        %410 = vadd.xlane.f32.xlu0 %v405
        %v411 = vpop.xlane.xlu0 %410
        %vm412 = vcmp.eq.s32.totalorder %v234, 2
        %v413 = vsel %vm412, %v386, %v376
        %v414 = vsel %vm412, %v388, %v377
        %v415 = vsel %vm412, %v390, %v378
        %v416 = vsel %vm412, %v407, %v379
        %v417 = vsel %vm412, %v409, %v380
        %v418 = vsel %vm412, %v411, %v381
        %v419 = vsel %vm282, %v299, 0.0
        %v420 = vsel %vm282, %v301, 0.0
        %v421 = vsel %vm282, %v303, 0.0
        %422 = vadd.xlane.f32.xlu0 %v419
        %v423 = vpop.xlane.xlu0 %422
        %424 = vadd.xlane.f32.xlu0 %v420
        %v425 = vpop.xlane.xlu0 %424
        %426 = vadd.xlane.f32.xlu0 %v421
        %v427 = vpop.xlane.xlu0 %426
        %428 = vset.pattern.permute.xlu0 3
        %429 = vperm.xlu0 %428, %v305
        %v430 = vpop.permute.xlu0 %429
        %431 = vset.pattern.permute.xlu0 3
        %432 = vperm.xlu0 %431, %v306
        %v433 = vpop.permute.xlu0 %432
        %434 = vset.pattern.permute.xlu0 3
        %435 = vperm.xlu0 %434, %v307
        %v436 = vpop.permute.xlu0 %435
        %vm437 = vcmp.eq.s32.totalorder %v234, %v430
        %vm438 = vcmp.eq.s32.totalorder %v234, %v433
        %vm439 = vcmp.eq.s32.totalorder %v234, %v436
        %v440 = vsel %vm437, %v295, 0.0
        %v441 = vsel %vm438, %v296, 0.0
        %v442 = vsel %vm439, %v297, 0.0
        %443 = vadd.xlane.f32.xlu0 %v440
        %v444 = vpop.xlane.xlu0 %443
        %445 = vadd.xlane.f32.xlu0 %v441
        %v446 = vpop.xlane.xlu0 %445
        %447 = vadd.xlane.f32.xlu0 %v442
        %v448 = vpop.xlane.xlu0 %447
        %vm449 = vcmp.eq.s32.totalorder %v234, 3
        %v450 = vsel %vm449, %v423, %v413
        %v451 = vsel %vm449, %v425, %v414
        %v452 = vsel %vm449, %v427, %v415
        %v453 = vsel %vm449, %v444, %v416
        %v454 = vsel %vm449, %v446, %v417
        %v455 = vsel %vm449, %v448, %v418
        %v456 = vlog2.pop %v450
        %v457 = vmul.f32 %v456, 0.6931472
        %v458 = vlog2.pop %v451
        %v459 = vmul.f32 %v458, 0.6931472
        %v460 = vlog2.pop %v452
        %v461 = vmul.f32 %v460, 0.6931472
        %v462 = vsub.f32 %v457, %v453
        %v463 = vsub.f32 %v459, %v454
        %v464 = vsub.f32 %v461, %v455
        %v465 = vsub.f32 0.0, %v462
        %v466 = vsub.f32 0.0, %v463
        %v467 = vsub.f32 0.0, %v464
        %v468 = vmul.f32 %v465, 1.442695
        %v469 = vpow.pop %v468
        %v470 = vmul.f32 %v466, 1.442695
        %v471 = vpow.pop %v470
        %v472 = vmul.f32 %v467, 1.442695
        %v473 = vpow.pop %v472
        %v474 = vsub.f32 1.0, %v469
        %v475 = vsub.f32 1.0, %v471
        %v476 = vsub.f32 1.0, %v473
        %v477 = vmul.f32 %v474, %v474
        %v478 = vmul.f32 %v475, %v475
        %v479 = vmul.f32 %v476, %v476
        %v480 = vmul.f32 %v477, %v462
        %v481 = vmul.f32 %v478, %v463
        %v482 = vmul.f32 %v479, %v464
        %v483 = vsel %vm227, %v480, 0.0
        %v484 = vsel %vm228, %v481, 0.0
        %v485 = vsel %vm229, %v482, 0.0
        %vm486 = vcmask 31744
        %v487 = vsel %vm486, %v483, 0.0
        %v488 = vsel %vm486, %v484, 0.0
        %v489 = vadd.f32 %v487, %v488
        %v490 = vsel %vm486, %v485, 0.0
        %v491 = vadd.f32 %v489, %v490
        %492 = vadd.xlane.f32.xlu0 %v491
        %v493 = vpop.xlane.xlu0 %492
        %v494 = vrot.slane %v493, 4
        %v495 = vadd.f32 %v493, %v494
        %v496 = vrot.slane %v495, 2
        %v497 = vadd.f32 %v495, %v496
        %v498 = vrot.slane %v497, 1
        %v499 = vadd.f32 %v497, %v498
        %s500 = vtos %v499
        %v501 = vsel %vm227, 1, 0
        %v502 = vsel %vm228, 1, 0
        %v503 = vsel %vm229, 1, 0
        %v504 = vcvt.s32.f32 %v501
        %v505 = vcvt.s32.f32 %v502
        %v506 = vcvt.s32.f32 %v503
        %v507 = vsel %vm486, %v504, 0.0
        %v508 = vsel %vm486, %v505, 0.0
        %v509 = vadd.f32 %v507, %v508
        %v510 = vsel %vm486, %v506, 0.0
        %v511 = vadd.f32 %v509, %v510
        %512 = vadd.xlane.f32.xlu0 %v511
        %v513 = vpop.xlane.xlu0 %512
        %v514 = vrot.slane %v513, 4
        %v515 = vadd.f32 %v513, %v514
        %v516 = vrot.slane %v515, 2
        %v517 = vadd.f32 %v515, %v516
        %v518 = vrot.slane %v517, 1
        %v519 = vadd.f32 %v517, %v518
        %s520 = vtos %v519
        %v521 = vstv %s520
        %v522 = vsel %vm375, %v521, 0.0
        %v523 = vstv %s500
        %v524 = vsel %vm338, %v523, %v522
        %525 = vst [vmem:[%s177] sm:$0xff] %v524
        %s526 = sand.u32 %s76, 1
        %s527 = scalar_lea.sflag [#allocation3], %s526
        %s528 = sand.u32 %s76, 1
        %s529 = smul.addr %s528, 8
        %s530 = scalar_lea.vmem [#allocation2], %s529
        // Predicated region
        $region29: #{tpu_custom_call.1} parent=27 // pred_check
          %p531 = pneg %p86
        $region30: #{tpu_custom_call.1} parent=27 // pred_check_branch
          %533 = sbr.rel (%p531) target = $region32
        $region31: #{tpu_custom_call.1} parent=27 // pred_region
          %535 = vsyncadd %s527, 0
          %s536 = smul.addr %s16, 8
          %s537 = scalar_lea.hbm %s2, %s536
          %s539 = sshll.u32 %s530, 4
          %s540 = int_to_ptr.vmem [resolvable:$true] %s539
          %s541 = sshll.u32 %s537, 4
          %s542 = int_to_ptr.hbm [resolvable:$true] %s541
          %544 = dma.vmem_to_hbm [thread:$0]  %s540, 128, %s542, %s527
        $region32: #{tpu_custom_call.1} parent=27 // pred_fallthru
          _
      $region28: #{tpu_custom_call.1} parent=5 // pred_fallthru
        _
      %p545 = scmp.le.s32.totalorder 2, %s11
      // Predicated region
      $region33: #{tpu_custom_call.1} parent=5 // pred_check
        %p546 = pneg %p545
      $region34: #{tpu_custom_call.1} parent=5 // pred_check_branch
        %548 = sbr.rel (%p546) target = $region36
      $region35: #{tpu_custom_call.1} parent=5 // pred_region
        %s549 = ssub.s32 %s11, 2
        // Predicated region
        $region37: #{tpu_custom_call.1} parent=35 // pred_check
          %p550 = pneg %p92
        $region38: #{tpu_custom_call.1} parent=35 // pred_check_branch
          %552 = sbr.rel (%p550) target = $region40
        $region39: #{tpu_custom_call.1} parent=35 // pred_region
          %s553 = sand.u32 %s77, 1
          %s554 = scalar_lea.sflag [#allocation3], %s553
          %s555 = sand.u32 %s77, 1
          %s556 = smul.addr %s555, 8
          %s557 = scalar_lea.vmem [#allocation2], %s556
          %559 = dma.done %s554, 128
        $region40: #{tpu_custom_call.1} parent=35 // pred_fallthru
          _
      $region36: #{tpu_custom_call.1} parent=5 // pred_fallthru
        _
    $region6: #{tpu_custom_call.1} parent=1 // loop_footer
      %s15 = sadd.s32 1, %s11
    $region7: #{tpu_custom_call.1} parent=1 // loop_footer_branch
      %10 = sbr.rel target = $region3
    $region8: #{tpu_custom_call.1} parent=1 // loop_exit
      _
    %560 = vsyncpa [#allocation3], 1
    %s561 = scalar_lea.sflag [#allocation3], 1
    %562 = vsyncpa %s561, 1

</llo_original>
